<compile_context>
chip_gen: v7x
topology: tpu7x:2x2x1
jax: 0.10.0
libtpu: 0.0.40
codegen_flags: <defaults>
</compile_context>

<pallas_src>
import functools
import math

import jax
import jax.numpy as jnp
from jax.experimental import pallas as pl
from jax.experimental.pallas import tpu as pltpu


def _round_up(x, m):
    return (x + m - 1) // m * m


# ----------------------------------------------------------------------------
# Kernel: one (TM x Nout) output tile = sum_r x_ext[t0+r : t0+r+TM] @ Wc[r] + b
# ----------------------------------------------------------------------------
def _upsample_kernel(x_ref, w_ref, b_ref, o_ref, *, tm, taps):
    # x_ref: [1, T_pad + R - 1, Cin]   whole padded time slab for this batch
    #                                  (resident in VMEM across the T tiles)
    # w_ref: [R, Cin, Nout]            combined polyphase weight (resident)
    # b_ref: [1, Nout]                 phase-replicated bias (resident)
    # o_ref: [1, TM, Nout]             lane-dense output tile
    t0 = pl.multiple_of(pl.program_id(1) * tm, 8)
    acc = jnp.dot(x_ref[0, pl.ds(t0, tm), :], w_ref[0],
                  preferred_element_type=jnp.float32)
    for r in range(1, taps):
        acc += jnp.dot(x_ref[0, pl.ds(t0 + r, tm), :], w_ref[r],
                       preferred_element_type=jnp.float32)
    o_ref[0] = (acc + b_ref[...]).astype(o_ref.dtype)


# ----------------------------------------------------------------------------
# Polyphase (combined-weight) decomposition of ConvTranspose1d
# ----------------------------------------------------------------------------
def _build_combined_weight(weight, bias, s, padding, nout_pad):
    """weight: [Cin, Cout, K] (PyTorch ConvTranspose1d layout), bias: [Cout]."""
    cin, cout, K = weight.shape
    taps = []  # (phase p, kernel tap k, input offset o)   y[t*s+p] += x[t+o]·w[k]
    for p in range(s):
        k0 = (p + padding) % s
        q = (p + padding) // s
        j = 0
        while k0 + j * s < K:
            taps.append((p, k0 + j * s, q - j))
            j += 1
    off_min = min(o for _, _, o in taps)
    off_max = max(o for _, _, o in taps)
    R = off_max - off_min + 1
    wc = jnp.zeros((R, cin, nout_pad), weight.dtype)
    for p, k, o in taps:
        wc = wc.at[o - off_min, :, p * cout:(p + 1) * cout].set(weight[:, :, k])
    b2 = jnp.zeros((1, nout_pad), jnp.float32).at[0, :s * cout].set(
        jnp.tile(bias.astype(jnp.float32), (s,)))
    return wc, b2, off_min, off_max, R


# ----------------------------------------------------------------------------
# Forward wrapper (keeps the PyTorch NCT layout at the boundary)
# ----------------------------------------------------------------------------
@functools.partial(jax.jit, static_argnames=("kernel_size", "scale_factor",
                                             "tm_max", "compute_dtype"))
def upsample_forward(x, weight, bias, *, kernel_size, scale_factor,
                     tm_max=512, compute_dtype="float32"):
    """x: [B, Cin, T]  ->  [B, Cout, T * scale_factor]."""
    B, Cin, T = x.shape
    Cin_w, Cout, K = weight.shape
    assert Cin == Cin_w and K == kernel_size
    s = scale_factor
    assert K >= s and (K - s) % 2 == 0
    P = (K - s) // 2
    cdt = jnp.bfloat16 if compute_dtype == "bfloat16" else jnp.float32

    nout = s * Cout
    nout_pad = _round_up(nout, 128)                       # lane-dense stores
    wc, b2, off_min, off_max, R = _build_combined_weight(weight, bias, s, P,
                                                         nout_pad)

    # Time tiling (rows on sublanes); TM multiple of 8, <= tm_max.
    T8 = _round_up(T, 8)
    TM = min(_round_up(tm_max, 8), T8)
    T_pad = _round_up(T, TM)
    nT = T_pad // TM

    # Channels-last halo-extended slab: x_ext[b, u, :] = x[b, u + off_min, :]
    # (zeros outside [0, T)), length T_pad + R - 1.
    x_tc = jnp.transpose(x, (0, 2, 1))                    # [B, T, Cin]
    pad_lo = max(0, -off_min)
    pad_hi = off_max + (T_pad - T)
    xp = jnp.pad(x_tc, ((0, 0), (pad_lo, pad_hi), (0, 0)))
    start = off_min + pad_lo
    x_ext = jax.lax.slice_in_dim(xp, start, start + T_pad + R - 1, axis=1)

    x_ext = x_ext.astype(cdt)
    wc = wc.astype(cdt)

    # VMEM budget (double-buffered) -> explicit limit, capped for v7x (64 MiB).
    esz = 2 if cdt == jnp.bfloat16 else 4
    vmem_est = (2 * (T_pad + R - 1) * Cin * esz           # input slab
                + 2 * TM * nout_pad * 4                   # output tiles
                + 2 * R * Cin * nout_pad * esz            # weights
                + 2 * nout_pad * 4)                       # bias
    vmem_limit = int(min(max(2 * vmem_est, 32 * 1024 * 1024), 64 * 1024 * 1024))

    kernel = functools.partial(_upsample_kernel, tm=TM, taps=R)
    y = pl.pallas_call(
        kernel,
        out_shape=jax.ShapeDtypeStruct((B, T_pad, nout_pad), jnp.float32),
        grid=(B, nT),
        in_specs=[
            pl.BlockSpec((1, T_pad + R - 1, Cin), lambda b, i: (b, 0, 0)),
            pl.BlockSpec((R, Cin, nout_pad), lambda b, i: (0, 0, 0)),
            pl.BlockSpec((1, nout_pad), lambda b, i: (0, 0)),
        ],
        out_specs=pl.BlockSpec((1, TM, nout_pad), lambda b, i: (b, i, 0)),
        compiler_params=pltpu.CompilerParams(
            dimension_semantics=("parallel", "parallel"),
            vmem_limit_bytes=vmem_limit,
        ),
    )(x_ext, wc, b2)

    y = y[:, :T, :nout]                                   # drop tile/lane pads
    y = y.reshape(B, T * s, Cout)                         # interleave phases
    return jnp.transpose(y, (0, 2, 1))                    # [B, Cout, T*s]


# ----------------------------------------------------------------------------
if __name__ == "__main__":
    key = jax.random.PRNGKey(0)
    B, Cin, Cout, T = 2, 64, 64, 16
    K, S = 4, 2                                           # (K - S) even, K >= S
    P = (K - S) // 2

    kx, kw, kb = jax.random.split(key, 3)
    x = jax.random.normal(kx, (B, Cin, T), jnp.float32)
    # TODO(synk): ConvTranspose_Init(w_init_gain='linear') xavier init not
    # reproduced exactly; deterministic scaled-normal init used instead.
    w = jax.random.normal(kw, (Cin, Cout, K), jnp.float32) / math.sqrt(Cin * K)
    b = jax.random.normal(kb, (Cout,), jnp.float32) * 0.01

    y = upsample_forward(x, w, b, kernel_size=K, scale_factor=S)
    jax.block_until_ready(y)
    assert y.shape == (B, Cout, T * S)

    # Reference: ConvTranspose1d == dilated conv with flipped/transposed weight.
    ref = jax.lax.conv_general_dilated(
        x,
        jnp.flip(w, axis=2).transpose(1, 0, 2),           # [Cout, Cin, K]
        window_strides=(1,),
        padding=[(K - 1 - P, K - 1 - P)],
        lhs_dilation=(S,),
        dimension_numbers=("NCH", "OIH", "NCH"),
        precision=jax.lax.Precision.HIGHEST,
    ) + b[None, :, None]
    jax.block_until_ready(ref)

    assert bool(jnp.all(jnp.isfinite(y)))
    max_err = float(jnp.max(jnp.abs(y - ref)))
    assert max_err < 1e-2, f"mismatch vs reference: max abs err {max_err}"
    print("KERNEL_OK")
</pallas_src>

<mosaic_0001>
module attributes {stable_mosaic.version = 11 : i64} {
  func.func @_upsample_kernel(%arg0: i32, %arg1: i32, %arg2: memref<1x18x64xf32, #tpu.memory_space<vmem>>, %arg3: memref<3x64x128xf32, #tpu.memory_space<vmem>>, %arg4: memref<1x128xf32, #tpu.memory_space<vmem>>, %arg5: memref<1x16x128xf32, #tpu.memory_space<vmem>>) attributes {dimension_semantics = [#tpu.dimension_semantics<parallel>, #tpu.dimension_semantics<parallel>], iteration_bounds = array<i64: 2, 1>, scalar_prefetch = 0 : i64, scratch_operands = 0 : i64, tpu.core_type = #tpu.core_type<tc>, window_params = [{transform_indices = @transform_0, window_bounds = array<i64: 1, 18, 64>}, {pipeline_mode = #tpu.pipeline_mode<synchronous>, transform_indices = @transform_1, window_bounds = array<i64: 3, 64, 128>}, {pipeline_mode = #tpu.pipeline_mode<synchronous>, transform_indices = @transform_2, window_bounds = array<i64: 1, 128>}, {transform_indices = @transform_3, window_bounds = array<i64: 1, 16, 128>}]} {
    %c16_i32 = arith.constant 16 : i32
    %0 = arith.muli %arg1, %c16_i32 : i32
    %1 = tpu.assume_multiple %0, 8 : i32
    %c0 = arith.constant 0 : index
    %2 = arith.index_cast %1 : i32 to index
    %c0_0 = arith.constant 0 : index
    %3 = vector.load %arg2[%c0, %2, %c0_0] : memref<1x18x64xf32, #tpu.memory_space<vmem>>, vector<1x16x64xf32>
    %4 = vector.shape_cast %3 : vector<1x16x64xf32> to vector<16x64xf32>
    %c0_1 = arith.constant 0 : index
    %c0_2 = arith.constant 0 : index
    %c0_3 = arith.constant 0 : index
    %5 = vector.load %arg3[%c0_1, %c0_2, %c0_3] : memref<3x64x128xf32, #tpu.memory_space<vmem>>, vector<1x64x128xf32>
    %6 = vector.shape_cast %5 : vector<1x64x128xf32> to vector<64x128xf32>
    %cst = arith.constant dense<0.000000e+00> : vector<16x128xf32>
    %7 = tpu.matmul %4, %6, %cst {dimension_numbers = #tpu.dot_dimension_numbers<[1], [0], [0], [1], [0, 0, 1, 1], [], []>} : vector<16x64xf32>, vector<64x128xf32>, vector<16x128xf32> -> vector<16x128xf32>
    %c1_i32 = arith.constant 1 : i32
    %8 = arith.addi %1, %c1_i32 : i32
    %c0_4 = arith.constant 0 : index
    %9 = arith.index_cast %8 : i32 to index
    %c0_5 = arith.constant 0 : index
    %10 = vector.load %arg2[%c0_4, %9, %c0_5] : memref<1x18x64xf32, #tpu.memory_space<vmem>>, vector<1x16x64xf32>
    %11 = vector.shape_cast %10 : vector<1x16x64xf32> to vector<16x64xf32>
    %c1 = arith.constant 1 : index
    %c0_6 = arith.constant 0 : index
    %c0_7 = arith.constant 0 : index
    %12 = vector.load %arg3[%c1, %c0_6, %c0_7] : memref<3x64x128xf32, #tpu.memory_space<vmem>>, vector<1x64x128xf32>
    %13 = vector.shape_cast %12 : vector<1x64x128xf32> to vector<64x128xf32>
    %cst_8 = arith.constant dense<0.000000e+00> : vector<16x128xf32>
    %14 = tpu.matmul %11, %13, %cst_8 {dimension_numbers = #tpu.dot_dimension_numbers<[1], [0], [0], [1], [0, 0, 1, 1], [], []>} : vector<16x64xf32>, vector<64x128xf32>, vector<16x128xf32> -> vector<16x128xf32>
    %15 = arith.addf %7, %14 : vector<16x128xf32>
    %c2_i32 = arith.constant 2 : i32
    %16 = arith.addi %1, %c2_i32 : i32
    %c0_9 = arith.constant 0 : index
    %17 = arith.index_cast %16 : i32 to index
    %c0_10 = arith.constant 0 : index
    %18 = vector.load %arg2[%c0_9, %17, %c0_10] : memref<1x18x64xf32, #tpu.memory_space<vmem>>, vector<1x16x64xf32>
    %19 = vector.shape_cast %18 : vector<1x16x64xf32> to vector<16x64xf32>
    %c2 = arith.constant 2 : index
    %c0_11 = arith.constant 0 : index
    %c0_12 = arith.constant 0 : index
    %20 = vector.load %arg3[%c2, %c0_11, %c0_12] : memref<3x64x128xf32, #tpu.memory_space<vmem>>, vector<1x64x128xf32>
    %21 = vector.shape_cast %20 : vector<1x64x128xf32> to vector<64x128xf32>
    %cst_13 = arith.constant dense<0.000000e+00> : vector<16x128xf32>
    %22 = tpu.matmul %19, %21, %cst_13 {dimension_numbers = #tpu.dot_dimension_numbers<[1], [0], [0], [1], [0, 0, 1, 1], [], []>} : vector<16x64xf32>, vector<64x128xf32>, vector<16x128xf32> -> vector<16x128xf32>
    %23 = arith.addf %15, %22 : vector<16x128xf32>
    %c0_14 = arith.constant 0 : index
    %c0_15 = arith.constant 0 : index
    %24 = vector.load %arg4[%c0_14, %c0_15] : memref<1x128xf32, #tpu.memory_space<vmem>>, vector<1x128xf32>
    %25 = vector.broadcast %24 : vector<1x128xf32> to vector<16x128xf32>
    %26 = arith.addf %23, %25 : vector<16x128xf32>
    %c0_16 = arith.constant 0 : index
    %c0_17 = arith.constant 0 : index
    %c0_18 = arith.constant 0 : index
    %27 = vector.load %arg5[%c0_16, %c0_17, %c0_18] : memref<1x16x128xf32, #tpu.memory_space<vmem>>, vector<1x16x128xf32>
    %28 = vector.shape_cast %27 : vector<1x16x128xf32> to vector<16x128xf32>
    %29 = vector.shape_cast %26 : vector<16x128xf32> to vector<1x16x128xf32>
    tpu.vector_store %arg5[%c0_16, %c0_17, %c0_18], %29 {strides = array<i32>} : memref<1x16x128xf32, #tpu.memory_space<vmem>>, vector<1x16x128xf32>,
    return
  }
  func.func @transform_0(%arg0: i32, %arg1: i32) -> (i32, i32, i32) {
    %c0_i32 = arith.constant 0 : i32
    %c0_i32_0 = arith.constant 0 : i32
    %c0_i32_1 = arith.constant 0 : i32
    return %arg0, %c0_i32, %c0_i32_0 : i32, i32, i32
  }
  func.func @transform_1(%arg0: i32, %arg1: i32) -> (i32, i32, i32) {
    %c0_i32 = arith.constant 0 : i32
    %c0_i32_0 = arith.constant 0 : i32
    %c0_i32_1 = arith.constant 0 : i32
    %c0_i32_2 = arith.constant 0 : i32
    return %c0_i32, %c0_i32_0, %c0_i32_1 : i32, i32, i32
  }
  func.func @transform_2(%arg0: i32, %arg1: i32) -> (i32, i32) {
    %c0_i32 = arith.constant 0 : i32
    %c0_i32_0 = arith.constant 0 : i32
    %c0_i32_1 = arith.constant 0 : i32
    return %c0_i32, %c0_i32_0 : i32, i32
  }
  func.func @transform_3(%arg0: i32, %arg1: i32) -> (i32, i32, i32) {
    %c0_i32 = arith.constant 0 : i32
    %c0_i32_0 = arith.constant 0 : i32
    return %arg0, %arg1, %c0_i32 : i32, i32, i32
  }
}

</mosaic_0001>

<llo_original>
// kernel: tile.8
$region0: #{tile.8}
  #allocation0 [shape = 's32[1]{0}', space=sflag, size = 0x4, scoped, tag = 'scoped memory for tile.8']
  %s0 = inlined_call_operand.vmem [shape: f32[64], index: 0, kind: input, shape index: {}]
  %s1 = inlined_call_operand.vmem [shape: f32[2,64], index: 1, kind: output, shape index: {}]
  // Predicated region
  $region2: #{tile.8} parent=0 // pred_check
    _
  $region3: #{tile.8} parent=0 // pred_check_branch
    %3 = sbr.rel (0) target = $region5
  $region4: #{tile.8} parent=0 // pred_region
    _
  $region5: #{tile.8} parent=0 // pred_fallthru
    _
  %v4 = vld [vmem:[%s0] ss:$0 sm:$0xff]
  %5 = vst [vmem:[%s1] sm:$0x3] %v4

// kernel: upsample_forward.1
$region0: #{upsample_forward.1}
  #allocation0 [shape = 'u32[]', space=smem, size = 0x4, offset = 0x4, fixed_abs, tag = 'smem constant byte address 0x4 - core index']
  #allocation1 [shape = 'u32[144,128]{1,0:T(1,128)}', space=vmem, size = 0x12000, scoped, tag = 'internal scratch']
  %s0 = inlined_call_operand.vmem [shape: f32[2,18,64], index: 0, kind: input, shape index: {}]
  %s1 = inlined_call_operand.vmem [shape: f32[3,64,128], index: 1, kind: input, shape index: {}]
  %s2 = inlined_call_operand.vmem [shape: f32[1,128], index: 2, kind: input, shape index: {}]
  %s3 = inlined_call_operand.vmem [shape: f32[2,16,128], index: 3, kind: output, shape index: {}]
  %s4 = sld [smem:[#allocation0]]
  $region45: #{upsample_forward.1} parent=0
    _
  %s6 = ssub.s32 1, %s4
  %s7 = scalar_select 0, %s6, %s4
  loop: start=0, step=1, limit=4
  $region2: #{upsample_forward.1} parent=0 // loop_pre_header
    _
  $region3: #{upsample_forward.1} parent=0 // loop_header
    %s9 = sphi 0, %s13
    %p10 = scmp.ge.s32.totalorder %s9, 4
    %s16 = sphi 0, %s28
    %s17 = sphi 0, %s24
    %s18 = sphi 0, %s16
    %s19 = sphi 0, %s17
    %s20 = sphi 0, %s18
    %s21 = sphi 0, %s19
    %s31 = sphi 0, %s33
    %s34 = sphi 0, %s31
    %s35 = sphi 0, %s34
    %s51 = sphi 0, %s35
    %s55 = sphi 0, %s55
    %s57 = sphi 0, %s55
    %s58 = sphi 0, %s57
    %s72 = sphi 0, %s58
    %s76 = sphi 0, %s76
    %s78 = sphi 0, %s76
    %s79 = sphi 0, %s78
    %s93 = sphi 0, %s79
    %s101 = sphi 0, %s103
    %s104 = sphi 0, %s101
    %s105 = sphi 0, %s104
    %s121 = sphi 0, %s105
  $region4: #{upsample_forward.1} parent=0 // loop_header_branch
    %12 = sbr.rel (%p10) target = $region8
  $region5: #{upsample_forward.1} parent=0 // loop_body
    %s14 = ssub.s32 %s9, 1
    %s15 = ssub.s32 %s9, 2
    %s22 = sadd.s32 1, %s17
    %p23 = scmp.ge.s32.totalorder %s22, 1
    %s24 = scalar_select %p23, 0, %s22
    %s25 = sadd.s32 1, %s16
    %s26 = scalar_select %p23, %s25, %s16
    %p27 = scmp.ge.s32.totalorder %s26, 2
    %s28 = scalar_select %p27, 0, %s26
    %s29 = ssub.s32 %s16, %s28
    %p30 = scmp.eq.s32.totalorder %s29, 0
    %s32 = sadd.s32 %s31, 1
    %s33 = scalar_select %p30, %s31, %s32
    %p36 = pneg %p30
    %p37 = scmp.eq.s32.totalorder %s9, 1
    %p38 = por %p36, %p37
    %p39 = scmp.ne.s32.totalorder %s31, %s34
    %p40 = scmp.eq.s32.totalorder %s9, 0
    %p41 = por %p39, %p40
    %p42 = scmp.ne.s32.totalorder %s31, %s34
    %p43 = scmp.eq.s32.totalorder %s14, 1
    %p44 = por %p42, %p43
    %p45 = scmp.ne.s32.totalorder %s34, %s35
    %p46 = scmp.eq.s32.totalorder %s14, 0
    %p47 = por %p45, %p46
    %p48 = scmp.ne.s32.totalorder %s34, %s35
    %p49 = scmp.eq.s32.totalorder %s15, 1
    %p50 = por %p48, %p49
    %p52 = scmp.ne.s32.totalorder %s35, %s51
    %p53 = scmp.eq.s32.totalorder %s15, 0
    %p54 = por %p52, %p53
    %s56 = sadd.s32 %s55, 1
    %p59 = scmp.eq.s32.totalorder %s9, 1
    %p60 = scmp.ne.s32.totalorder %s55, %s57
    %p61 = scmp.eq.s32.totalorder %s9, 0
    %p62 = por %p60, %p61
    %p63 = scmp.ne.s32.totalorder %s55, %s57
    %p64 = scmp.eq.s32.totalorder %s14, 1
    %p65 = por %p63, %p64
    %p66 = scmp.ne.s32.totalorder %s57, %s58
    %p67 = scmp.eq.s32.totalorder %s14, 0
    %p68 = por %p66, %p67
    %p69 = scmp.ne.s32.totalorder %s57, %s58
    %p70 = scmp.eq.s32.totalorder %s15, 1
    %p71 = por %p69, %p70
    %p73 = scmp.ne.s32.totalorder %s58, %s72
    %p74 = scmp.eq.s32.totalorder %s15, 0
    %p75 = por %p73, %p74
    %s77 = sadd.s32 %s76, 1
    %p80 = scmp.eq.s32.totalorder %s9, 1
    %p81 = scmp.ne.s32.totalorder %s76, %s78
    %p82 = scmp.eq.s32.totalorder %s9, 0
    %p83 = por %p81, %p82
    %p84 = scmp.ne.s32.totalorder %s76, %s78
    %p85 = scmp.eq.s32.totalorder %s14, 1
    %p86 = por %p84, %p85
    %p87 = scmp.ne.s32.totalorder %s78, %s79
    %p88 = scmp.eq.s32.totalorder %s14, 0
    %p89 = por %p87, %p88
    %p90 = scmp.ne.s32.totalorder %s78, %s79
    %p91 = scmp.eq.s32.totalorder %s15, 1
    %p92 = por %p90, %p91
    %p94 = scmp.ne.s32.totalorder %s79, %s93
    %p95 = scmp.eq.s32.totalorder %s15, 0
    %p96 = por %p94, %p95
    %s97 = ssub.s32 %s16, %s28
    %s98 = ssub.s32 %s17, %s24
    %s99 = sor.u32 %s97, %s98
    %p100 = scmp.eq.s32.totalorder %s99, 0
    %s102 = sadd.s32 %s101, 1
    %s103 = scalar_select %p100, %s101, %s102
    %p106 = pneg %p100
    %p107 = scmp.eq.s32.totalorder %s9, 1
    %p108 = por %p106, %p107
    %p109 = scmp.ne.s32.totalorder %s101, %s104
    %p110 = scmp.eq.s32.totalorder %s9, 0
    %p111 = por %p109, %p110
    %p112 = scmp.ne.s32.totalorder %s101, %s104
    %p113 = scmp.eq.s32.totalorder %s14, 1
    %p114 = por %p112, %p113
    %p115 = scmp.ne.s32.totalorder %s104, %s105
    %p116 = scmp.eq.s32.totalorder %s14, 0
    %p117 = por %p115, %p116
    %p118 = scmp.ne.s32.totalorder %s104, %s105
    %p119 = scmp.eq.s32.totalorder %s15, 1
    %p120 = por %p118, %p119
    %p122 = scmp.ne.s32.totalorder %s105, %s121
    %p123 = scmp.eq.s32.totalorder %s15, 0
    %p124 = por %p122, %p123
    %p125 = scmp.le.s32.totalorder 1, %s9
    %p126 = scmp.lt.s32.totalorder %s9, 3
    %p127 = pnand %p125, %p126
    %p128 = pneg %p127
    // Predicated region
    $region9: #{upsample_forward.1} parent=5 // pred_check
      _
    $region10: #{upsample_forward.1} parent=5 // pred_check_branch
      %130 = sbr.rel (%p127) target = $region12
    $region11: #{upsample_forward.1} parent=5 // pred_region
      %s131 = ssub.s32 %s9, 1
      // Predicated region
      $region13: #{upsample_forward.1} parent=11 // pred_check
        %p132 = pneg %p68
      $region14: #{upsample_forward.1} parent=11 // pred_check_branch
        %134 = sbr.rel (%p132) target = $region16
      $region15: #{upsample_forward.1} parent=11 // pred_region
        _
      $region16: #{upsample_forward.1} parent=11 // pred_fallthru
        _
      // Predicated region
      $region17: #{upsample_forward.1} parent=11 // pred_check
        %p135 = pneg %p89
      $region18: #{upsample_forward.1} parent=11 // pred_check_branch
        %137 = sbr.rel (%p135) target = $region20
      $region19: #{upsample_forward.1} parent=11 // pred_region
        _
      $region20: #{upsample_forward.1} parent=11 // pred_fallthru
        _
    $region12: #{upsample_forward.1} parent=5 // pred_fallthru
      _
    %p138 = scmp.lt.s32.totalorder %s9, 2
    // Predicated region
    $region21: #{upsample_forward.1} parent=5 // pred_check
      %p139 = pneg %p138
    $region22: #{upsample_forward.1} parent=5 // pred_check_branch
      %141 = sbr.rel (%p139) target = $region24
    $region23: #{upsample_forward.1} parent=5 // pred_region
      // Predicated region
      $region25: #{upsample_forward.1} parent=23 // pred_check
        %p142 = pneg %p41
      $region26: #{upsample_forward.1} parent=23 // pred_check_branch
        %144 = sbr.rel (%p142) target = $region28
      $region27: #{upsample_forward.1} parent=23 // pred_region
        %p145 = scmp.lt.s32.totalorder %s16, 1
        %s146 = scalar_select %p145, %s16, 1
        %s147 = smul.addr %s146, 3
        %s148 = smul.addr %s147, 8
        %s149 = scalar_lea.vmem %s0, %s148
      $region28: #{upsample_forward.1} parent=23 // pred_fallthru
        _
    $region24: #{upsample_forward.1} parent=5 // pred_fallthru
      _
    %p150 = scmp.le.s32.totalorder 1, %s9
    %p151 = scmp.lt.s32.totalorder %s9, 3
    %p152 = pnand %p150, %p151
    %p153 = pneg %p152
    // Predicated region
    $region29: #{upsample_forward.1} parent=5 // pred_check
      _
    $region30: #{upsample_forward.1} parent=5 // pred_check_branch
      %155 = sbr.rel (%p152) target = $region32
    $region31: #{upsample_forward.1} parent=5 // pred_region
      %s156 = ssub.s32 %s9, 1
      %p157 = scmp.lt.s32.totalorder %s18, 1
      %s158 = scalar_select %p157, %s18, 1
      %s159 = smul.addr %s158, 3
      %s160 = smul.addr %s159, 8
      %s161 = scalar_lea.vmem %s0, %s160
      %p162 = pneg %p47
      %p163 = pneg %p44
      %p164 = pneg %p68
      %p165 = pneg %p65
      %p166 = pneg %p89
      %p167 = pneg %p86
      %p168 = pneg %p117
      %p169 = pneg %p114
      %s170 = smul.u32 2, %s19
      %p171 = scmp.lt.s32.totalorder %s18, 1
      %s172 = scalar_select %p171, %s18, 1
      %p173 = scmp.lt.s32.totalorder %s170, 1
      %s174 = scalar_select %p173, %s170, 1
      %s175 = smul.addr %s172, 2
      %s176 = sadd.s32 %s174, %s175
      %s177 = smul.addr %s176, 8
      %s178 = scalar_lea.vmem %s3, %s177
      %p179 = scmp.lt.s32.totalorder %s18, 1
      %s180 = scalar_select %p179, %s18, 1
      %s181 = smul.addr %s180, 3
      %s182 = smul.addr %s181, 8
      %s183 = scalar_lea.vmem %s0, %s182
      %s184 = smul.u32 2, %s19
      %p185 = scmp.lt.s32.totalorder %s18, 1
      %s186 = scalar_select %p185, %s18, 1
      %p187 = scmp.lt.s32.totalorder %s184, 1
      %s188 = scalar_select %p187, %s184, 1
      %s189 = smul.addr %s186, 2
      %s190 = sadd.s32 %s188, %s189
      %s191 = smul.addr %s190, 8
      %s192 = scalar_lea.vmem %s3, %s191
      %s193 = smul.u32 2, %s19
      %s194 = smul.u32 %s19, 16
      %s195 = scalar_lea.vmem %s183, %s194
      %v196 = vld [vmem:[%s195] sm:$0xff]
      %v197 = vld [vmem:[%s195 + $0x8] sm:$0xff]
      %v198 = vld [vmem:[%s1] sm:$0xff]
      %v199 = vld [vmem:[%s1 + $0x8] sm:$0xff]
      %v200 = vld [vmem:[%s1 + $0x10] sm:$0xff]
      %v201 = vld [vmem:[%s1 + $0x18] sm:$0xff]
      %v202 = vld [vmem:[%s1 + $0x20] sm:$0xff]
      %v203 = vld [vmem:[%s1 + $0x28] sm:$0xff]
      %v204 = vld [vmem:[%s1 + $0x30] sm:$0xff]
      %v205 = vld [vmem:[%s1 + $0x38] sm:$0xff]
      %s206 = sadd.s32 %s194, 1
      %s207 = scalar_lea.vmem %s183, %s206
      %v208 = vld [vmem:[%s207] sm:$0xff]
      %v209 = vld [vmem:[%s207 + $0x8] sm:$0xff]
      %s210 = scalar_lea.vmem %s1, 64
      %v211 = vld [vmem:[%s210] sm:$0xff]
      %v212 = vld [vmem:[%s210 + $0x8] sm:$0xff]
      %v213 = vld [vmem:[%s210 + $0x10] sm:$0xff]
      %v214 = vld [vmem:[%s210 + $0x18] sm:$0xff]
      %v215 = vld [vmem:[%s210 + $0x20] sm:$0xff]
      %v216 = vld [vmem:[%s210 + $0x28] sm:$0xff]
      %v217 = vld [vmem:[%s210 + $0x30] sm:$0xff]
      %v218 = vld [vmem:[%s210 + $0x38] sm:$0xff]
      %vm219 = vcmask 523264
      %v221 = vsel %vm219, %v208, 0
      %v224 = vsel %vm219, %v209, 0
      %226 = vmatprep.subr.mxu0 0.0
      %227 = vmatpush1.msra.mxu0 %v211
      %228 = vmatprep.subr.mxu0 0.0
      %229 = vmatpush1.msra.mxu0 %v212
      %230 = vmatprep.subr.mxu0 0.0
      %231 = vmatpush1.msra.mxu0 %v213
      %232 = vmatprep.subr.mxu0 0.0
      %233 = vmatpush1.msra.mxu0 %v214
      %234 = vmatprep.subr.mxu0 0.0
      %235 = vmatpush1.msra.mxu0 %v215
      %236 = vmatprep.subr.mxu0 0.0
      %237 = vmatpush1.msra.mxu0 %v216
      %238 = vmatprep.subr.mxu0 0.0
      %239 = vmatpush1.msra.mxu0 %v217
      %240 = vmatprep.subr.mxu0 0.0
      %241 = vmatpush1.msra.mxu0 %v218
      %242 = vmatprep.subr.mxu0 0.0
      %243 = vmatpush1.msra.mxu0 0.0
      %244 = vmatprep.subr.mxu0 0.0
      %245 = vmatpush1.msra.mxu0 0.0
      %246 = vmatprep.subr.mxu0 0.0
      %247 = vmatpush1.msra.mxu0 0.0
      %248 = vmatprep.subr.mxu0 0.0
      %249 = vmatpush1.msra.mxu0 0.0
      %250 = vmatprep.subr.mxu0 0.0
      %251 = vmatpush1.msra.mxu0 0.0
      %252 = vmatprep.subr.mxu0 0.0
      %253 = vmatpush1.msra.mxu0 0.0
      %254 = vmatprep.subr.mxu0 0.0
      %255 = vmatpush1.msra.mxu0 0.0
      %256 = vmatprep.subr.mxu0 0.0
      %257 = vmatpush1.msra.mxu0 0.0
      %258 = vmatprep.subr.mxu0 0.0
      %259 = vmatpush1.msra.mxu0 0.0
      %260 = vmatprep.subr.mxu0 0.0
      %261 = vmatpush1.msra.mxu0 0.0
      %262 = vmatprep.subr.mxu0 0.0
      %263 = vmatpush1.msra.mxu0 0.0
      %264 = vmatprep.subr.mxu0 0.0
      %265 = vmatpush1.msra.mxu0 0.0
      %266 = vmatprep.subr.mxu0 0.0
      %267 = vmatpush1.msra.mxu0 0.0
      %268 = vmatprep.subr.mxu0 0.0
      %269 = vmatpush1.msra.mxu0 0.0
      %270 = vmatprep.subr.mxu0 0.0
      %271 = vmatpush1.msra.mxu0 0.0
      %272 = vmatprep.subr.mxu0 0.0
      %273 = vmatpush1.msra.mxu0 0.0
      %274 = vmatprep.subr.mxu0 0.0
      %275 = vmatpush1.msra.mxu0 0.0
      %276 = vmatprep.subr.mxu0 0.0
      %277 = vmatpush1.msra.mxu0 0.0
      %278 = vmatprep.subr.mxu0 0.0
      %279 = vmatpush1.msra.mxu0 0.0
      %280 = vmatprep.subr.mxu0 0.0
      %281 = vmatpush1.msra.mxu0 0.0
      %282 = vmatprep.subr.mxu0 0.0
      %283 = vmatpush1.msra.mxu0 0.0
      %284 = vmatprep.subr.mxu0 0.0
      %285 = vmatpush1.msra.mxu0 0.0
      %286 = vmatprep.subr.mxu0 0.0
      %287 = vmatpush1.msra.mxu0 0.0
      %288 = vmatprep.subr.mxu0 0.0
      %289 = vmatpush1.msra.mxu0 0.0
      %290 = vmatprep.mubr.f32.mxu0 0.0
      %291 = vmatmul.mubr.f32.gmra.mrb[0].mxu0 %v221
      %v292 = vpop.f32.mrb[0].mxu0
      %v293 = vadd.f32 0.0, %v292
      %v294 = vpop.f32.mrb[0].mxu0
      %295 = vmatprep.mubr.f32.mxu0 0.0
      %296 = vmatmul.mubr.f32.gmra.mrb[0].mxu0 %v224
      %v297 = vpop.f32.mrb[0].mxu0
      %v298 = vadd.f32 0.0, %v297
      %v299 = vpop.f32.mrb[0].mxu0
      %300 = vdwg.mxu0
      %v302 = vsel %vm219, %v196, 0
      %v305 = vsel %vm219, %v197, 0
      %307 = vmatprep.subr.mxu0 0.0
      %308 = vmatpush1.msra.mxu0 %v198
      %309 = vmatprep.subr.mxu0 0.0
      %310 = vmatpush1.msra.mxu0 %v199
      %311 = vmatprep.subr.mxu0 0.0
      %312 = vmatpush1.msra.mxu0 %v200
      %313 = vmatprep.subr.mxu0 0.0
      %314 = vmatpush1.msra.mxu0 %v201
      %315 = vmatprep.subr.mxu0 0.0
      %316 = vmatpush1.msra.mxu0 %v202
      %317 = vmatprep.subr.mxu0 0.0
      %318 = vmatpush1.msra.mxu0 %v203
      %319 = vmatprep.subr.mxu0 0.0
      %320 = vmatpush1.msra.mxu0 %v204
      %321 = vmatprep.subr.mxu0 0.0
      %322 = vmatpush1.msra.mxu0 %v205
      %323 = vmatprep.subr.mxu0 0.0
      %324 = vmatpush1.msra.mxu0 0.0
      %325 = vmatprep.subr.mxu0 0.0
      %326 = vmatpush1.msra.mxu0 0.0
      %327 = vmatprep.subr.mxu0 0.0
      %328 = vmatpush1.msra.mxu0 0.0
      %329 = vmatprep.subr.mxu0 0.0
      %330 = vmatpush1.msra.mxu0 0.0
      %331 = vmatprep.subr.mxu0 0.0
      %332 = vmatpush1.msra.mxu0 0.0
      %333 = vmatprep.subr.mxu0 0.0
      %334 = vmatpush1.msra.mxu0 0.0
      %335 = vmatprep.subr.mxu0 0.0
      %336 = vmatpush1.msra.mxu0 0.0
      %337 = vmatprep.subr.mxu0 0.0
      %338 = vmatpush1.msra.mxu0 0.0
      %339 = vmatprep.subr.mxu0 0.0
      %340 = vmatpush1.msra.mxu0 0.0
      %341 = vmatprep.subr.mxu0 0.0
      %342 = vmatpush1.msra.mxu0 0.0
      %343 = vmatprep.subr.mxu0 0.0
      %344 = vmatpush1.msra.mxu0 0.0
      %345 = vmatprep.subr.mxu0 0.0
      %346 = vmatpush1.msra.mxu0 0.0
      %347 = vmatprep.subr.mxu0 0.0
      %348 = vmatpush1.msra.mxu0 0.0
      %349 = vmatprep.subr.mxu0 0.0
      %350 = vmatpush1.msra.mxu0 0.0
      %351 = vmatprep.subr.mxu0 0.0
      %352 = vmatpush1.msra.mxu0 0.0
      %353 = vmatprep.subr.mxu0 0.0
      %354 = vmatpush1.msra.mxu0 0.0
      %355 = vmatprep.subr.mxu0 0.0
      %356 = vmatpush1.msra.mxu0 0.0
      %357 = vmatprep.subr.mxu0 0.0
      %358 = vmatpush1.msra.mxu0 0.0
      %359 = vmatprep.subr.mxu0 0.0
      %360 = vmatpush1.msra.mxu0 0.0
      %361 = vmatprep.subr.mxu0 0.0
      %362 = vmatpush1.msra.mxu0 0.0
      %363 = vmatprep.subr.mxu0 0.0
      %364 = vmatpush1.msra.mxu0 0.0
      %365 = vmatprep.subr.mxu0 0.0
      %366 = vmatpush1.msra.mxu0 0.0
      %367 = vmatprep.subr.mxu0 0.0
      %368 = vmatpush1.msra.mxu0 0.0
      %369 = vmatprep.subr.mxu0 0.0
      %370 = vmatpush1.msra.mxu0 0.0
      %371 = vmatprep.mubr.f32.mxu0 0.0
      %372 = vmatmul.mubr.f32.gmra.mrb[0].mxu0 %v302
      %v373 = vpop.f32.mrb[0].mxu0
      %v374 = vadd.f32 %v293, %v373
      %v375 = vpop.f32.mrb[0].mxu0
      %376 = vmatprep.mubr.f32.mxu0 0.0
      %377 = vmatmul.mubr.f32.gmra.mrb[0].mxu0 %v305
      %v378 = vpop.f32.mrb[0].mxu0
      %v379 = vadd.f32 %v298, %v378
      %v380 = vpop.f32.mrb[0].mxu0
      %381 = vdwg.mxu0
      %s382 = sadd.s32 %s194, 2
      %s383 = scalar_lea.vmem %s183, %s382
      %v384 = vld [vmem:[%s383] sm:$0xff]
      %v385 = vld [vmem:[%s383 + $0x8] sm:$0xff]
      %s386 = scalar_lea.vmem %s1, 128
      %v387 = vld [vmem:[%s386] sm:$0xff]
      %v388 = vld [vmem:[%s386 + $0x8] sm:$0xff]
      %v389 = vld [vmem:[%s386 + $0x10] sm:$0xff]
      %v390 = vld [vmem:[%s386 + $0x18] sm:$0xff]
      %v391 = vld [vmem:[%s386 + $0x20] sm:$0xff]
      %v392 = vld [vmem:[%s386 + $0x28] sm:$0xff]
      %v393 = vld [vmem:[%s386 + $0x30] sm:$0xff]
      %v394 = vld [vmem:[%s386 + $0x38] sm:$0xff]
      %v396 = vsel %vm219, %v384, 0
      %v399 = vsel %vm219, %v385, 0
      %401 = vmatprep.subr.mxu0 0.0
      %402 = vmatpush1.msra.mxu0 %v387
      %403 = vmatprep.subr.mxu0 0.0
      %404 = vmatpush1.msra.mxu0 %v388
      %405 = vmatprep.subr.mxu0 0.0
      %406 = vmatpush1.msra.mxu0 %v389
      %407 = vmatprep.subr.mxu0 0.0
      %408 = vmatpush1.msra.mxu0 %v390
      %409 = vmatprep.subr.mxu0 0.0
      %410 = vmatpush1.msra.mxu0 %v391
      %411 = vmatprep.subr.mxu0 0.0
      %412 = vmatpush1.msra.mxu0 %v392
      %413 = vmatprep.subr.mxu0 0.0
      %414 = vmatpush1.msra.mxu0 %v393
      %415 = vmatprep.subr.mxu0 0.0
      %416 = vmatpush1.msra.mxu0 %v394
      %417 = vmatprep.subr.mxu0 0.0
      %418 = vmatpush1.msra.mxu0 0.0
      %419 = vmatprep.subr.mxu0 0.0
      %420 = vmatpush1.msra.mxu0 0.0
      %421 = vmatprep.subr.mxu0 0.0
      %422 = vmatpush1.msra.mxu0 0.0
      %423 = vmatprep.subr.mxu0 0.0
      %424 = vmatpush1.msra.mxu0 0.0
      %425 = vmatprep.subr.mxu0 0.0
      %426 = vmatpush1.msra.mxu0 0.0
      %427 = vmatprep.subr.mxu0 0.0
      %428 = vmatpush1.msra.mxu0 0.0
      %429 = vmatprep.subr.mxu0 0.0
      %430 = vmatpush1.msra.mxu0 0.0
      %431 = vmatprep.subr.mxu0 0.0
      %432 = vmatpush1.msra.mxu0 0.0
      %433 = vmatprep.subr.mxu0 0.0
      %434 = vmatpush1.msra.mxu0 0.0
      %435 = vmatprep.subr.mxu0 0.0
      %436 = vmatpush1.msra.mxu0 0.0
      %437 = vmatprep.subr.mxu0 0.0
      %438 = vmatpush1.msra.mxu0 0.0
      %439 = vmatprep.subr.mxu0 0.0
      %440 = vmatpush1.msra.mxu0 0.0
      %441 = vmatprep.subr.mxu0 0.0
      %442 = vmatpush1.msra.mxu0 0.0
      %443 = vmatprep.subr.mxu0 0.0
      %444 = vmatpush1.msra.mxu0 0.0
      %445 = vmatprep.subr.mxu0 0.0
      %446 = vmatpush1.msra.mxu0 0.0
      %447 = vmatprep.subr.mxu0 0.0
      %448 = vmatpush1.msra.mxu0 0.0
      %449 = vmatprep.subr.mxu0 0.0
      %450 = vmatpush1.msra.mxu0 0.0
      %451 = vmatprep.subr.mxu0 0.0
      %452 = vmatpush1.msra.mxu0 0.0
      %453 = vmatprep.subr.mxu0 0.0
      %454 = vmatpush1.msra.mxu0 0.0
      %455 = vmatprep.subr.mxu0 0.0
      %456 = vmatpush1.msra.mxu0 0.0
      %457 = vmatprep.subr.mxu0 0.0
      %458 = vmatpush1.msra.mxu0 0.0
      %459 = vmatprep.subr.mxu0 0.0
      %460 = vmatpush1.msra.mxu0 0.0
      %461 = vmatprep.subr.mxu0 0.0
      %462 = vmatpush1.msra.mxu0 0.0
      %463 = vmatprep.subr.mxu0 0.0
      %464 = vmatpush1.msra.mxu0 0.0
      %465 = vmatprep.mubr.f32.mxu0 0.0
      %466 = vmatmul.mubr.f32.gmra.mrb[0].mxu0 %v396
      %v467 = vpop.f32.mrb[0].mxu0
      %v468 = vadd.f32 0.0, %v467
      %v469 = vpop.f32.mrb[0].mxu0
      %470 = vmatprep.mubr.f32.mxu0 0.0
      %471 = vmatmul.mubr.f32.gmra.mrb[0].mxu0 %v399
      %v472 = vpop.f32.mrb[0].mxu0
      %v473 = vadd.f32 0.0, %v472
      %v474 = vpop.f32.mrb[0].mxu0
      %475 = vdwg.mxu0
      %v476 = vadd.f32 %v374, %v468
      %v477 = vadd.f32 %v379, %v473
      %v478 = vld [vmem:[%s2] sm:$0x1]
      %v480 = vlaneseq
      %v481 = vshrl.u32 %v480, 7
      %v482 = vsub.s32 0, %v481
      %v483 = vrot.slane %v478, %v482
      %v485 = vadd.f32 %v476, %v483
      %v486 = vadd.f32 %v477, %v483
      %487 = vst [vmem:[%s192] sm:$0xff] %v485
      %488 = vst [vmem:[%s192 + $0x8] sm:$0xff] %v486
      %s489 = smul.u32 2, %s19
      %p490 = scmp.lt.s32.totalorder %s18, 1
      %s491 = scalar_select %p490, %s18, 1
      %p492 = scmp.lt.s32.totalorder %s489, 1
      %s493 = scalar_select %p492, %s489, 1
      %s494 = smul.addr %s491, 2
      %s495 = sadd.s32 %s493, %s494
      %s496 = smul.addr %s495, 8
      %s497 = scalar_lea.vmem %s3, %s496
      // Predicated region
      $region33: #{upsample_forward.1} parent=31 // pred_check
        %p498 = pneg %p114
      $region34: #{upsample_forward.1} parent=31 // pred_check_branch
        %500 = sbr.rel (%p498) target = $region36
      $region35: #{upsample_forward.1} parent=31 // pred_region
        %s501 = smul.u32 2, %s19
      $region36: #{upsample_forward.1} parent=31 // pred_fallthru
        _
    $region32: #{upsample_forward.1} parent=5 // pred_fallthru
      _
    %p502 = scmp.le.s32.totalorder 2, %s9
    // Predicated region
    $region37: #{upsample_forward.1} parent=5 // pred_check
      %p503 = pneg %p502
    $region38: #{upsample_forward.1} parent=5 // pred_check_branch
      %505 = sbr.rel (%p503) target = $region40
    $region39: #{upsample_forward.1} parent=5 // pred_region
      %s506 = ssub.s32 %s9, 2
      // Predicated region
      $region41: #{upsample_forward.1} parent=39 // pred_check
        %p507 = pneg %p120
      $region42: #{upsample_forward.1} parent=39 // pred_check_branch
        %509 = sbr.rel (%p507) target = $region44
      $region43: #{upsample_forward.1} parent=39 // pred_region
        %s510 = smul.u32 2, %s21
        %p511 = scmp.lt.s32.totalorder %s20, 1
        %s512 = scalar_select %p511, %s20, 1
        %p513 = scmp.lt.s32.totalorder %s510, 1
        %s514 = scalar_select %p513, %s510, 1
        %s515 = smul.addr %s512, 2
        %s516 = sadd.s32 %s514, %s515
        %s517 = smul.addr %s516, 8
        %s518 = scalar_lea.vmem %s3, %s517
      $region44: #{upsample_forward.1} parent=39 // pred_fallthru
        _
    $region40: #{upsample_forward.1} parent=5 // pred_fallthru
      _
  $region6: #{upsample_forward.1} parent=0 // loop_footer
    %s13 = sadd.s32 1, %s9
  $region7: #{upsample_forward.1} parent=0 // loop_footer_branch
    %8 = sbr.rel target = $region3
  $region8: #{upsample_forward.1} parent=0 // loop_exit
    _

</llo_original>
